<compile_context>
chip_gen: v6e
topology: v6e:2x2x1
jax: 0.10.0
libtpu: 0.0.40
codegen_flags: <defaults>
</compile_context>

<pallas_src>
import functools
import math

import jax
import jax.numpy as jnp
from jax.experimental import pallas as pl
from jax.experimental.pallas import tpu as pltpu

# Per-buffer VMEM byte budget for the streamed output tile. With Pallas'
# default double buffering the output costs 2x this.
_TILE_BYTE_BUDGET = 8 * 1024 * 1024
_VMEM_LIMIT_BYTES = 32 * 1024 * 1024  # explicit, with headroom on v7x (64 MiB)


def _round_down(x: int, m: int) -> int:
    return (x // m) * m


def _round_up(x: int, m: int) -> int:
    return ((x + m - 1) // m) * m


def _pe_kernel(div_ref, o_ref):
    """Write one (tile_s, d_model) slab of the positional-encoding table.

    div_ref : (1, d_model) f32 — div_term value duplicated onto the sin lane
              2k and the cos lane 2k+1.
    o_ref   : (tile_s, d_model) f32 output slab.
    """
    ts, d = o_ref.shape
    i = pl.program_id(0)

    # Position as a (tile_s, 1) sublane column; per-tile offset folds into the
    # scalar i * ts.  int32 math is exact, cast once to f32 (positions < 2^24).
    pos = (jax.lax.broadcasted_iota(jnp.int32, (ts, 1), 0) + i * ts
           ).astype(jnp.float32)

    # angle[p, l] = p * freq[l]   (freq duplicated per sin/cos pair)
    ang = pos * div_ref[...]                      # (ts,1)*(1,d) -> (ts,d)

    # Even lanes -> sin, odd lanes -> cos.  cos computed explicitly so the
    # table matches the reference construction even for large positions
    # (no sin(x + pi/2) phase rounding).  Extra EUP work is irrelevant for a
    # build-once, cached table.
    lane = jax.lax.broadcasted_iota(jnp.int32, (1, d), 1)
    is_odd = (lane & 1) == 1
    o_ref[...] = jnp.where(is_odd, jnp.cos(ang), jnp.sin(ang))


@functools.lru_cache(maxsize=None)
def _pe_table(seq_len: int, d_model: int,
              tile_byte_budget: int = _TILE_BYTE_BUDGET) -> jax.Array:
    """Build the [seq_len, 1, d_model] float32 PE table once (then reused).

    Note: like the PyTorch register_buffer, the cached device array stays
    alive for the process lifetime; the cache key is static shapes only.
    """
    assert d_model % 2 == 0, "d_model must be even (as in the PyTorch module)"

    # div_term computed with the same jnp ops as the reference so the angles
    # (and therefore the table) match the non-Pallas construction to ulps.
    div_term = jnp.exp(
        jnp.arange(0, d_model, 2, dtype=jnp.float32)
        * (-math.log(10000.0) / float(d_model))
    )                                                   # (d_model // 2,)
    freq = jnp.repeat(div_term, 2).reshape(1, d_model)  # lanes 2k and 2k+1

    # Byte-budgeted row tile: large tiles amortize the ~0.35 us per-step
    # overhead of this output-streaming kernel, capped so double-buffered
    # output stays well within the scoped-VMEM limit on every chip.
    row_bytes = 4 * d_model
    budget_rows = max(8, _round_down(max(tile_byte_budget // row_bytes, 8), 8))
    if seq_len <= budget_rows:
        if seq_len > 8 and seq_len % 8 == 0:
            # Small table: still split into >=2 grid steps so both v7x
            # TensorCores (and both HBM write pipes) get work.
            tile_s = min(seq_len, max(8, _round_up(pl.cdiv(seq_len, 2), 8)))
        else:
            tile_s = seq_len          # full-extent block (always legal)
    else:
        tile_s = budget_rows          # multiple of 8; ragged last block is ok

    grid = (pl.cdiv(seq_len, tile_s),)

    pe_2d = pl.pallas_call(
        _pe_kernel,
        out_shape=jax.ShapeDtypeStruct((seq_len, d_model), jnp.float32),
        grid=grid,
        in_specs=[pl.BlockSpec((1, d_model), lambda i: (0, 0))],
        out_specs=pl.BlockSpec((tile_s, d_model), lambda i: (i, 0)),
        compiler_params=pltpu.CompilerParams(
            # "parallel" lets megacore shard the row axis; CORE_PARALLEL was
            # considered but kept off for portability across v5e/v6e/v7x.
            dimension_semantics=("parallel",),
            vmem_limit_bytes=_VMEM_LIMIT_BYTES,
        ),
    )(freq)

    # Re-insert the singleton batch axis of the registered buffer.
    return pe_2d[:, None, :]


def positional_encoding(x: jax.Array, d_model: int,
                        tile_byte_budget: int = _TILE_BYTE_BUDGET) -> jax.Array:
    """Mirror of PositionalEncoding.forward: returns pe[:seq_len].

    Args:
      x: [seq_len, batch, d_model] — only seq_len (a static shape) is used,
         exactly like the PyTorch module (values and batch are ignored).
    Returns:
      [seq_len, 1, d_model] float32 positional-encoding table.
    """
    seq_len = x.shape[0]
    assert x.shape[-1] == d_model
    # The table never depends on x's values; it is built once by the Pallas
    # kernel and reused for every subsequent forward call.
    return _pe_table(seq_len, d_model, tile_byte_budget)


def _reference(seq_len: int, d_model: int) -> jax.Array:
    """Pure-JAX transcription of the PyTorch buffer construction."""
    position = jnp.arange(seq_len, dtype=jnp.float32)[:, None]
    div_term = jnp.exp(
        jnp.arange(0, d_model, 2, dtype=jnp.float32)
        * (-math.log(10000.0) / d_model)
    )
    ref = jnp.zeros((seq_len, 1, d_model), dtype=jnp.float32)
    ref = ref.at[:, 0, 0::2].set(jnp.sin(position * div_term))
    ref = ref.at[:, 0, 1::2].set(jnp.cos(position * div_term))
    return ref


if __name__ == "__main__":
    key = jax.random.PRNGKey(0)

    # Case 1: small shapes consistent with the module (seq=8, batch=2, d=32).
    seq_len, batch, d_model = 8, 2, 32
    x = jax.random.normal(key, (seq_len, batch, d_model), dtype=jnp.float32)
    out = jax.block_until_ready(positional_encoding(x, d_model))
    ref = _reference(seq_len, d_model)
    assert out.shape == (seq_len, 1, d_model)
    assert out.dtype == jnp.float32
    assert jnp.allclose(out, ref, atol=1e-5, rtol=1e-5)

    # Case 2: d_model = 128 (lane-exact stores), >=2 grid steps at seq=16.
    seq_len2, d_model2 = 16, 128
    x2 = jax.random.normal(key, (seq_len2, batch, d_model2), dtype=jnp.float32)
    out2 = jax.block_until_ready(positional_encoding(x2, d_model2))
    ref2 = _reference(seq_len2, d_model2)
    assert out2.shape == (seq_len2, 1, d_model2)
    assert jnp.allclose(out2, ref2, atol=1e-5, rtol=1e-5)

    # Case 3: force the byte-budgeted multi-tile path (tiny budget -> 64-row
    # tiles, 4 grid steps, ragged final block) at larger positions.  The looser
    # tolerance only covers f32 sin/cos argument-reduction differences between
    # the Mosaic and XLA implementations at |angle| ~ 2e2 — the angle itself is
    # computed identically (no phase-shift trick).
    seq_len3, d_model3 = 200, 64
    x3 = jax.random.normal(key, (seq_len3, batch, d_model3), dtype=jnp.float32)
    out3 = jax.block_until_ready(
        positional_encoding(x3, d_model3, tile_byte_budget=16 * 1024))
    ref3 = _reference(seq_len3, d_model3)
    assert out3.shape == (seq_len3, 1, d_model3)
    assert jnp.allclose(out3, ref3, atol=1e-4, rtol=1e-4)

    print("KERNEL_OK")
</pallas_src>

<mosaic_0001>
module attributes {stable_mosaic.version = 11 : i64} {
  func.func @_pe_kernel(%arg0: i32, %arg1: memref<1x32xf32, #tpu.memory_space<vmem>>, %arg2: memref<8x32xf32, #tpu.memory_space<vmem>>) attributes {dimension_semantics = [#tpu.dimension_semantics<parallel>], iteration_bounds = array<i64: 1>, scalar_prefetch = 0 : i64, scratch_operands = 0 : i64, tpu.core_type = #tpu.core_type<tc>, window_params = [{pipeline_mode = #tpu.pipeline_mode<synchronous>, transform_indices = @transform_0, window_bounds = array<i64: 1, 32>}, {transform_indices = @transform_1, window_bounds = array<i64: 8, 32>}]} {
    %0 = tpu.iota {dimensions = array<i32: 0>} : vector<8x1xi32>
    %c8_i32 = arith.constant 8 : i32
    %1 = arith.muli %arg0, %c8_i32 : i32
    %2 = vector.broadcast %1 : i32 to vector<8x1xi32>
    %3 = arith.addi %0, %2 : vector<8x1xi32>
    %4 = arith.sitofp %3 : vector<8x1xi32> to vector<8x1xf32>
    %c0 = arith.constant 0 : index
    %c0_0 = arith.constant 0 : index
    %5 = vector.load %arg1[%c0, %c0_0] : memref<1x32xf32, #tpu.memory_space<vmem>>, vector<1x32xf32>
    %6 = vector.broadcast %4 : vector<8x1xf32> to vector<8x32xf32>
    %7 = vector.broadcast %5 : vector<1x32xf32> to vector<8x32xf32>
    %8 = arith.mulf %6, %7 : vector<8x32xf32>
    %9 = tpu.iota {dimensions = array<i32: 1>} : vector<1x32xi32>
    %c1_i32 = arith.constant 1 : i32
    %10 = vector.broadcast %c1_i32 : i32 to vector<1x32xi32>
    %11 = arith.andi %9, %10 : vector<1x32xi32>
    %c1_i32_1 = arith.constant 1 : i32
    %12 = vector.broadcast %c1_i32_1 : i32 to vector<1x32xi32>
    %13 = arith.cmpi eq, %11, %12 : vector<1x32xi32>
    %14 = math.cos %8 : vector<8x32xf32>
    %15 = math.sin %8 : vector<8x32xf32>
    %16 = vector.shape_cast %13 : vector<1x32xi1> to vector<1x32xi1>
    %17 = vector.broadcast %16 : vector<1x32xi1> to vector<8x32xi1>
    %18 = arith.select %17, %14, %15 : vector<8x32xi1>, vector<8x32xf32>
    %c0_2 = arith.constant 0 : index
    %c0_3 = arith.constant 0 : index
    %19 = vector.load %arg2[%c0_2, %c0_3] : memref<8x32xf32, #tpu.memory_space<vmem>>, vector<8x32xf32>
    tpu.vector_store %arg2[%c0_2, %c0_3], %18 {strides = array<i32>} : memref<8x32xf32, #tpu.memory_space<vmem>>, vector<8x32xf32>,
    return
  }
  func.func @transform_0(%arg0: i32) -> (i32, i32) {
    %c0_i32 = arith.constant 0 : i32
    %c0_i32_0 = arith.constant 0 : i32
    %c0_i32_1 = arith.constant 0 : i32
    return %c0_i32, %c0_i32_0 : i32, i32
  }
  func.func @transform_1(%arg0: i32) -> (i32, i32) {
    %c0_i32 = arith.constant 0 : i32
    %c0_i32_0 = arith.constant 0 : i32
    return %arg0, %c0_i32 : i32, i32
  }
}

</mosaic_0001>

<llo_original>
// kernel: tpu_custom_call.1
$region0: #{tpu_custom_call.1}
  #allocation0 [shape = 'u32[]', space=smem, size = 0x4, offset = 0x4, fixed_abs, tag = 'smem constant byte address 0x4 - core index']
  #allocation1 [shape = 'u32[144,128]{1,0:T(1,128)}', space=vmem, size = 0x12000, scoped, tag = 'internal scratch']
  %s0 = inlined_call_operand.hbm [shape: f32[1,32], index: 0, kind: input, shape index: {}]
  %s1 = inlined_call_operand.hbm [shape: f32[8,32], index: 1, kind: output, shape index: {}]
  %s2 = sld [smem:[#allocation0]]
  $region18: #{tpu_custom_call.1} parent=0
    _
  %s4 = ssub.s32 1, %s2
  %s5 = scalar_select 0, %s4, %s2
  $region1: #{tpu_custom_call.1} parent=0
    #allocation2 [shape = 'u8[512]{0}', space=vmem, size = 0x400, scoped, tag = 'input window, operand 0, single buffered']
    #allocation3 [shape = 's32[1]{0}', space=sflag, size = 0x4, scoped, tag = 'scoped memory for tpu_custom_call.1']
    #allocation4 [shape = 's32[1]{0}', space=sflag, size = 0x4, scoped, tag = 'scoped memory for tpu_custom_call.1']
    #allocation5 [shape = 'u8[4096]{0}', space=vmem, size = 0x1000, scoped, tag = 'output window, operand 0, single buffered']
    %6 = vsyncpa [#allocation3], 0
    %7 = vsyncpa [#allocation4], 0
    // Predicated region
    $region2: #{tpu_custom_call.1} parent=1 // pred_check
      _
    $region3: #{tpu_custom_call.1} parent=1 // pred_check_branch
      %9 = sbr.rel (0) target = $region5
    $region4: #{tpu_custom_call.1} parent=1 // pred_region
      %s11 = ssub.s32 16, 16
      %12 = vsyncadd [#allocation3], %s11
      %s14 = sshll.u32 [#allocation2], 4
      %s15 = int_to_ptr.vmem [resolvable:$true] %s14
      %17 = dma.hbm_to_vmem [thread:$0]  %s0, 16, %s15, [#allocation3]
    $region5: #{tpu_custom_call.1} parent=1 // pred_fallthru
      _
    // Predicated region
    $region6: #{tpu_custom_call.1} parent=1 // pred_check
      _
    $region7: #{tpu_custom_call.1} parent=1 // pred_check_branch
      %19 = sbr.rel (0) target = $region9
    $region8: #{tpu_custom_call.1} parent=1 // pred_region
      %20 = dma.done [#allocation3], 16
    $region9: #{tpu_custom_call.1} parent=1 // pred_fallthru
      _
    %v21 = vlaneseq
    %v22 = vshrl.u32 %v21, 7
    %s23 = smul.u32 0, 8
    %v24 = vstv %s23
    %v25 = vadd.s32 %v22, %v24
    %v26 = vcvt.s32.f32 %v25
    %v27 = vld [vmem:[#allocation2] sm:$0x1]
    %v29 = vlaneseq
    %v30 = vshrl.u32 %v29, 7
    %v31 = vsub.s32 0, %v30
    %v32 = vrot.slane %v27, %v31
    %v34 = vmul.f32 %v26, %v32
    %v35 = vlaneseq
    %v36 = vand.u32 %v35, 127
    %v37 = vand.u32 %v36, 1
    %vm38 = vcmp.eq.s32.totalorder %v37, 1
    %v39 = vand.u32 2147483647, %v34
    %vm40 = vcmp.le.f32.partialorder %v39, 0.7853982
    %vm41 = vcmp.lt.s32.totalorder %v34, 0
    %v42 = vand.u32 %v34, 2139095040
    %v43 = vshrl.u32 %v42, 23
    %v44 = vsub.s32 %v43, 127
    %v45 = vand.u32 2147483647, %v34
    %v46 = vand.u32 %v45, 8388607
    %v47 = vor.u32 %v46, 8388608
    %v48 = vsub.s32 0, %v47
    %v49 = vadd.s32 %v44, 1
    %vm50 = vcmp.gt.s32.totalorder %v49, 0
    %v51 = vsel %vm50, %v49, 0
    %v52 = vshrl.u32 %v51, 5
    %v53 = vand.u32 %v51, 31
    %v54 = vsub.s32 32, %v53
    %v55 = vshrl.u32 683565275, %v54
    %v56 = vshll.u32 683565275, %v53
    %v57 = vshrl.u32 2475754826, %v54
    %v58 = vor.u32 %v56, %v57
    %v59 = vshll.u32 2475754826, %v53
    %v60 = vshrl.u32 2131351028, %v54
    %v61 = vor.u32 %v59, %v60
    %v62 = vshll.u32 2131351028, %v53
    %v63 = vshrl.u32 2102212464, %v54
    %v64 = vor.u32 %v62, %v63
    %v65 = vshll.u32 2102212464, %v53
    %v66 = vshrl.u32 920167782, %v54
    %v67 = vor.u32 %v65, %v66
    %v68 = vshll.u32 920167782, %v53
    %v69 = vshrl.u32 1326507024, %v54
    %v70 = vor.u32 %v68, %v69
    %vm71 = vcmp.lt.s32.totalorder %v52, 1
    %vm72 = vcmp.lt.s32.totalorder %v52, 2
    %vm73 = vcmp.lt.s32.totalorder %v52, 3
    %vm74 = vcmp.lt.s32.totalorder %v52, 4
    %v75 = vsel %vm71, %v55, %v58
    %v76 = vsel %vm74, %v64, 2102212464
    %v77 = vsel %vm73, %v61, %v76
    %v78 = vsel %vm72, %v75, %v77
    %v79 = vsel %vm71, %v58, %v61
    %v80 = vsel %vm74, %v67, 920167782
    %v81 = vsel %vm73, %v64, %v80
    %v82 = vsel %vm72, %v79, %v81
    %v83 = vsel %vm71, %v61, %v64
    %v84 = vsel %vm74, %v70, 1326507024
    %v85 = vsel %vm73, %v67, %v84
    %v86 = vsel %vm72, %v83, %v85
    %v87 = vshll.u32 %v47, 8
    %v88 = vmul.u32.u64.compose %v87, %v86
    %v89 = vextract.low.u32 %v88
    %v90 = vextract.high.u32 %v88
    %v91 = vmul.u32.u64.compose %v87, %v82
    %v92 = vextract.low.u32 %v91
    %v93 = vextract.high.u32 %v91
    %v94 = vmul.u32 %v87, %v78
    %v95 = vadd.s32 %v90, %v92
    %vm96 = vc.u32 %v90, %v92
    %v97 = vadd.s32 %v93, 1
    %v98 = vsel %vm96, %v97, %v93
    %v99 = vadd.s32 %v94, %v98
    %v100 = vadd.s32 %v99, 536870912
    %v101 = vshrl.u32 %v100, 30
    %v102 = vshll.u32 %v101, 30
    %v103 = vsub.s32 %v99, %v102
    %vm104 = vcmp.lt.s32.totalorder %v103, 0
    %v105 = vsub.s32 0, %v103
    %v106 = vsel %vm104, %v105, %v103
    %v107 = vclz %v106
    %v108 = vsub.s32 %v107, 2
    %vm109 = vcmp.gt.s32.totalorder 0, %v108
    %v110 = vsel %vm109, 0, %v108
    %v111 = vsub.s32 32, %v110
    %v112 = vshll.u32 %v103, %v110
    %v113 = vshrl.u32 %v95, %v111
    %v114 = vor.u32 %v112, %v113
    %v115 = vsub.s32 4294967266, %v110
    %v116 = vadd.s32 %v115, 127
    %v117 = vshll.u32 %v116, 23
    %v118 = vor.u32 4788187, %v117
    %v119 = vand.u32 2147483647, %v118
    %v121 = vcvt.s32.f32 %v114
    %v122 = vmul.f32 %v121, %v119
    %v123 = vxor.u32 %v122, 2147483648
    %v124 = vsel %vm41, %v123, %v122
    %v125 = vsub.s32 4, %v101
    %v126 = vsel %vm41, %v125, %v101
    %v127 = vsel %vm40, %v34, %v124
    %v128 = vsel %vm40, 0, %v126
    %v129 = vcosq.f32.pop %v127
    %v130 = vsinq.f32.pop %v127
    %vm131 = vweird.f32 %v34
    %v132 = vand.u32 %v128, 3
    %vm133 = vcmp.lt.s32.totalorder %v132, 2
    %vm134 = vcmp.eq.s32.totalorder %v132, 0
    %v135 = vxor.u32 %v130, 2147483648
    %v136 = vsel %vm134, %v129, %v135
    %vm137 = vcmp.eq.s32.totalorder %v132, 2
    %v138 = vxor.u32 %v129, 2147483648
    %v139 = vsel %vm137, %v138, %v130
    %v140 = vsel %vm133, %v136, %v139
    %v141 = vsel %vm131, nan, %v140
    %v142 = vand.u32 2147483647, %v34
    %vm143 = vcmp.le.f32.partialorder %v142, 0.7853982
    %vm144 = vcmp.lt.s32.totalorder %v34, 0
    %v145 = vand.u32 %v34, 2139095040
    %v146 = vshrl.u32 %v145, 23
    %v147 = vsub.s32 %v146, 127
    %v148 = vand.u32 2147483647, %v34
    %v149 = vand.u32 %v148, 8388607
    %v150 = vor.u32 %v149, 8388608
    %v151 = vsub.s32 0, %v150
    %v152 = vadd.s32 %v147, 1
    %vm153 = vcmp.gt.s32.totalorder %v152, 0
    %v154 = vsel %vm153, %v152, 0
    %v155 = vshrl.u32 %v154, 5
    %v156 = vand.u32 %v154, 31
    %v157 = vsub.s32 32, %v156
    %v158 = vshrl.u32 683565275, %v157
    %v159 = vshll.u32 683565275, %v156
    %v160 = vshrl.u32 2475754826, %v157
    %v161 = vor.u32 %v159, %v160
    %v162 = vshll.u32 2475754826, %v156
    %v163 = vshrl.u32 2131351028, %v157
    %v164 = vor.u32 %v162, %v163
    %v165 = vshll.u32 2131351028, %v156
    %v166 = vshrl.u32 2102212464, %v157
    %v167 = vor.u32 %v165, %v166
    %v168 = vshll.u32 2102212464, %v156
    %v169 = vshrl.u32 920167782, %v157
    %v170 = vor.u32 %v168, %v169
    %v171 = vshll.u32 920167782, %v156
    %v172 = vshrl.u32 1326507024, %v157
    %v173 = vor.u32 %v171, %v172
    %vm174 = vcmp.lt.s32.totalorder %v155, 1
    %vm175 = vcmp.lt.s32.totalorder %v155, 2
    %vm176 = vcmp.lt.s32.totalorder %v155, 3
    %vm177 = vcmp.lt.s32.totalorder %v155, 4
    %v178 = vsel %vm174, %v158, %v161
    %v179 = vsel %vm177, %v167, 2102212464
    %v180 = vsel %vm176, %v164, %v179
    %v181 = vsel %vm175, %v178, %v180
    %v182 = vsel %vm174, %v161, %v164
    %v183 = vsel %vm177, %v170, 920167782
    %v184 = vsel %vm176, %v167, %v183
    %v185 = vsel %vm175, %v182, %v184
    %v186 = vsel %vm174, %v164, %v167
    %v187 = vsel %vm177, %v173, 1326507024
    %v188 = vsel %vm176, %v170, %v187
    %v189 = vsel %vm175, %v186, %v188
    %v190 = vshll.u32 %v150, 8
    %v191 = vmul.u32.u64.compose %v190, %v189
    %v192 = vextract.low.u32 %v191
    %v193 = vextract.high.u32 %v191
    %v194 = vmul.u32.u64.compose %v190, %v185
    %v195 = vextract.low.u32 %v194
    %v196 = vextract.high.u32 %v194
    %v197 = vmul.u32 %v190, %v181
    %v198 = vadd.s32 %v193, %v195
    %vm199 = vc.u32 %v193, %v195
    %v200 = vadd.s32 %v196, 1
    %v201 = vsel %vm199, %v200, %v196
    %v202 = vadd.s32 %v197, %v201
    %v203 = vadd.s32 %v202, 536870912
    %v204 = vshrl.u32 %v203, 30
    %v205 = vshll.u32 %v204, 30
    %v206 = vsub.s32 %v202, %v205
    %vm207 = vcmp.lt.s32.totalorder %v206, 0
    %v208 = vsub.s32 0, %v206
    %v209 = vsel %vm207, %v208, %v206
    %v210 = vclz %v209
    %v211 = vsub.s32 %v210, 2
    %vm212 = vcmp.gt.s32.totalorder 0, %v211
    %v213 = vsel %vm212, 0, %v211
    %v214 = vsub.s32 32, %v213
    %v215 = vshll.u32 %v206, %v213
    %v216 = vshrl.u32 %v198, %v214
    %v217 = vor.u32 %v215, %v216
    %v218 = vsub.s32 4294967266, %v213
    %v219 = vadd.s32 %v218, 127
    %v220 = vshll.u32 %v219, 23
    %v221 = vor.u32 4788187, %v220
    %v222 = vand.u32 2147483647, %v221
    %v224 = vcvt.s32.f32 %v217
    %v225 = vmul.f32 %v224, %v222
    %v226 = vxor.u32 %v225, 2147483648
    %v227 = vsel %vm144, %v226, %v225
    %v228 = vsub.s32 4, %v204
    %v229 = vsel %vm144, %v228, %v204
    %v230 = vsel %vm143, %v34, %v227
    %v231 = vsel %vm143, 0, %v229
    %v232 = vcosq.f32.pop %v230
    %v233 = vsinq.f32.pop %v230
    %vm234 = vweird.f32 %v34
    %v235 = vadd.s32 %v231, 3
    %v236 = vand.u32 %v235, 3
    %vm237 = vcmp.lt.s32.totalorder %v236, 2
    %vm238 = vcmp.eq.s32.totalorder %v236, 0
    %v239 = vxor.u32 %v233, 2147483648
    %v240 = vsel %vm238, %v232, %v239
    %vm241 = vcmp.eq.s32.totalorder %v236, 2
    %v242 = vxor.u32 %v232, 2147483648
    %v243 = vsel %vm241, %v242, %v233
    %v244 = vsel %vm237, %v240, %v243
    %v245 = vsel %vm234, nan, %v244
    %v246 = vsel %vm38, 1, 0
    %vm247 = vcmp.eq.s32.totalorder %v246, 1
    %v248 = vsel %vm247, %v141, %v245
    %vm249 = vcmask 261120
    %250 = vst.msk [vmem:[#allocation5] sm:$0xff] %vm249, %v248
    // Predicated region
    $region10: #{tpu_custom_call.1} parent=1 // pred_check
      _
    $region11: #{tpu_custom_call.1} parent=1 // pred_check_branch
      %252 = sbr.rel (0) target = $region13
    $region12: #{tpu_custom_call.1} parent=1 // pred_region
      %s254 = ssub.s32 128, 128
      %255 = vsyncadd [#allocation4], %s254
      %s257 = sshll.u32 [#allocation5], 4
      %s258 = int_to_ptr.vmem [resolvable:$true] %s257
      %260 = dma.vmem_to_hbm [thread:$0]  %s258, 128, %s1, [#allocation4]
    $region13: #{tpu_custom_call.1} parent=1 // pred_fallthru
      _
    // Predicated region
    $region14: #{tpu_custom_call.1} parent=1 // pred_check
      _
    $region15: #{tpu_custom_call.1} parent=1 // pred_check_branch
      %262 = sbr.rel (0) target = $region17
    $region16: #{tpu_custom_call.1} parent=1 // pred_region
      %263 = dma.done [#allocation4], 128
    $region17: #{tpu_custom_call.1} parent=1 // pred_fallthru
      _
    %264 = vsyncpa [#allocation3], 1
    %265 = vsyncpa [#allocation4], 1

</llo_original>
